<compile_context>
chip_gen: v5e
topology: v5e:2x2
jax: 0.10.0
libtpu: 0.0.40
codegen_flags: <defaults>
</compile_context>

<pallas_src>
from functools import partial

import jax
import jax.numpy as jnp
from jax.experimental import pallas as pl
from jax.experimental.pallas import tpu as pltpu


# ---------------------------------------------------------------------------
# Generation-aware VMEM budget
# ---------------------------------------------------------------------------

def _vmem_budget_bytes():
    """~Half of physical VMEM (v5e/v6e -> 64 MiB, v7x -> 32 MiB), capped at 48 MiB."""
    cap = 64 << 20  # conservative default == v7x physical VMEM
    try:
        info = pltpu.get_tpu_info()
        cap = int(getattr(info, "vmem_capacity_bytes", cap))
    except Exception:
        pass
    return min(cap // 2, 48 << 20)


# ---------------------------------------------------------------------------
# Kernels
# ---------------------------------------------------------------------------

def _fused_kernel(x_ref, w1t_ref, w2t_ref, o_ref):
    """Whole video per grid step: squeeze + excite FCs + sigmoid + rescale.

    x_ref  : (1, t, C, HW)   one video, channel on sublanes, spatial on lanes
    w1t_ref: (Cr, C)         first FC transposed, pre-scaled by 1/(t*HW)
    w2t_ref: (C, Cr)         second FC transposed
    o_ref  : (1, t, C, HW)
    """
    xf = x_ref[0].astype(jnp.float32)                               # (t, C, HW)
    # Lane-axis reduce then leading(t)-axis reduce -> (C, 1) column; C never leaves
    # the sublane axis, so no relayout is required.
    col = jnp.sum(jnp.sum(xf, axis=-1, keepdims=True), axis=0)      # (C, 1)
    # MXU-native matvecs: contraction dim is LHS-lanes / RHS-sublanes.
    h = jnp.maximum(
        jnp.dot(w1t_ref[...], col, preferred_element_type=jnp.float32), 0.0)   # (Cr, 1)
    a = jax.nn.sigmoid(
        jnp.dot(w2t_ref[...], h, preferred_element_type=jnp.float32))          # (C, 1)
    o_ref[0] = x_ref[0] * a.astype(o_ref.dtype)[None, :, :]         # (t,C,HW)*(1,C,1)


def _pool_kernel(x_ref, sum_ref):
    """Accumulate per-video channel sums (fallback path).

    x_ref  : (1, T_TILE, C, tile_hw)
    sum_ref: (1, C, 1) f32 output-resident accumulator
    """
    ti = pl.program_id(1)
    hi = pl.program_id(2)

    # Init assumes the t/hw reduction axes are iterated fully within one vb value:
    # they are the trailing grid axes and are marked "arbitrary" (never split).
    @pl.when((ti == 0) & (hi == 0))
    def _():
        sum_ref[...] = jnp.zeros_like(sum_ref)

    part = jnp.sum(x_ref[0].astype(jnp.float32), axis=-1, keepdims=True)  # (T_TILE, C, 1)
    sum_ref[...] += jnp.sum(part, axis=0)[None]                           # (1, C, 1)


def _scale_kernel(a_ref, x_ref, o_ref):
    """Rescale a multi-frame spatial tile by its video's channel attention (fallback).

    a_ref: (1, C, 1)   x_ref/o_ref: (1, T_TILE, C, tile_hw)
    """
    a = a_ref[...]                                   # (1, C, 1)
    o_ref[...] = x_ref[...] * a[:, None, :, :]       # broadcast (1,1,C,1)


# ---------------------------------------------------------------------------
# Tiling helpers (fallback path)
# ---------------------------------------------------------------------------

def _pick_hw_tile(hw, c, itemsize, target_bytes):
    """Largest multiple-of-128 divisor of hw with c*tile*itemsize <= target, else full hw."""
    if hw % 128 != 0:
        # TODO(synk): irregular spatial sizes use a full-extent spatial block; ragged
        # cdiv tiling (safe for the scale pass, needs lane masking in the pool pass)
        # would bound VMEM tighter for very large non-%128 maps.
        return hw
    cap = max(128, (target_bytes // max(c * itemsize, 1)) // 128 * 128)
    d = min(cap, hw) // 128 * 128
    while d >= 128:
        if hw % d == 0:
            return d
        d -= 128
    return hw


def _pick_t_tile(t, frame_block_bytes, target_bytes):
    """Largest divisor of t so T_TILE frames fit the per-block byte target."""
    best = 1
    for d in range(1, t + 1):
        if t % d == 0 and d * frame_block_bytes <= target_bytes:
            best = d
    return best


# ---------------------------------------------------------------------------
# Wrapper
# ---------------------------------------------------------------------------

@partial(jax.jit, static_argnums=(3, 4, 5))
def coseg_se_attention(x_bt_chw, w1, w2, b, t, force_two_pass):
    """x_bt_chw: (b*t, C, H, W) NCHW clip.  Returns same shape/dtype."""
    bt, C, H, W = x_bt_chw.shape
    assert bt == b * t, "leading dim must be b*t"
    HW = H * W
    itemsize = x_bt_chw.dtype.itemsize
    nelem = b * t * C * HW
    x_bytes = nelem * itemsize
    Cr = w1.shape[1]

    budget = _vmem_budget_bytes()

    # Free, contiguous reshape only — no transposes, no extra HBM traffic.
    xv = x_bt_chw.reshape(b, t, C, HW)

    # Fold the 1/(t*HW) pooling normalization into the first FC weight (tiny op, fused).
    w1s = w1.astype(jnp.float32) * (1.0 / float(t * HW))    # (C, Cr)
    w2f = w2.astype(jnp.float32)                            # (Cr, C)

    # ---- Fused single-pass path: one read + one write of x ------------------
    video_f32_bytes = t * C * HW * 4          # budget in f32 terms (in-kernel temps)
    use_fused = (not force_two_pass) and (video_f32_bytes <= min(budget // 6, 8 << 20))

    if use_fused:
        cost = pl.CostEstimate(
            flops=3 * nelem + 4 * b * C * Cr,
            transcendentals=b * C,
            bytes_accessed=2 * x_bytes + (w1.size + w2.size) * 4)
        out = pl.pallas_call(
            _fused_kernel,
            out_shape=jax.ShapeDtypeStruct((b, t, C, HW), x_bt_chw.dtype),
            grid_spec=pltpu.PrefetchScalarGridSpec(
                num_scalar_prefetch=0,
                grid=(b,),
                in_specs=[
                    pl.BlockSpec((1, t, C, HW), lambda vb: (vb, 0, 0, 0)),
                    pl.BlockSpec((Cr, C), lambda vb: (0, 0)),
                    pl.BlockSpec((C, Cr), lambda vb: (0, 0)),
                ],
                out_specs=pl.BlockSpec((1, t, C, HW), lambda vb: (vb, 0, 0, 0)),
            ),
            compiler_params=pltpu.CompilerParams(
                dimension_semantics=("parallel",),
                vmem_limit_bytes=budget),
            cost_estimate=cost,
        )(xv, w1s.T, w2f.T)
        return out.reshape(bt, C, H, W)

    # ---- Fallback: two-pass path for videos too large for VMEM --------------
    tile_target = min(4 << 20, budget // 8)
    hw_tile = _pick_hw_tile(HW, C, itemsize, tile_target)
    n_hw = HW // hw_tile
    t_tile = _pick_t_tile(t, C * hw_tile * itemsize, tile_target)
    n_t = t // t_tile

    pool_cost = pl.CostEstimate(flops=nelem, transcendentals=0,
                                bytes_accessed=x_bytes + b * C * 4)
    sums = pl.pallas_call(
        _pool_kernel,
        out_shape=jax.ShapeDtypeStruct((b, C, 1), jnp.float32),
        grid_spec=pltpu.PrefetchScalarGridSpec(
            num_scalar_prefetch=0,
            grid=(b, n_t, n_hw),
            in_specs=[pl.BlockSpec((1, t_tile, C, hw_tile),
                                   lambda vb, ti, hi: (vb, ti, 0, hi))],
            out_specs=pl.BlockSpec((1, C, 1), lambda vb, ti, hi: (vb, 0, 0)),
        ),
        compiler_params=pltpu.CompilerParams(
            dimension_semantics=("parallel", "arbitrary", "arbitrary"),
            vmem_limit_bytes=budget),
        cost_estimate=pool_cost,
    )(xv)

    # Excite FCs batched over all videos at once (tiny, plain JAX; norm folded in w1s).
    pooled = sums[:, :, 0]                                   # (b, C)  (raw sums)
    h = jnp.maximum(pooled @ w1s, 0.0)                       # (b, Cr)
    a = jax.nn.sigmoid(h @ w2f)                              # (b, C)
    a_col = a.astype(x_bt_chw.dtype)[:, :, None]             # (b, C, 1)

    scale_cost = pl.CostEstimate(flops=nelem, transcendentals=0,
                                 bytes_accessed=2 * x_bytes + b * C * itemsize)
    out = pl.pallas_call(
        _scale_kernel,
        out_shape=jax.ShapeDtypeStruct((b, t, C, HW), x_bt_chw.dtype),
        grid_spec=pltpu.PrefetchScalarGridSpec(
            num_scalar_prefetch=0,
            grid=(b, n_t, n_hw),
            in_specs=[
                pl.BlockSpec((1, C, 1), lambda vb, ti, hi: (vb, 0, 0)),
                pl.BlockSpec((1, t_tile, C, hw_tile),
                             lambda vb, ti, hi: (vb, ti, 0, hi)),
            ],
            out_specs=pl.BlockSpec((1, t_tile, C, hw_tile),
                                   lambda vb, ti, hi: (vb, ti, 0, hi)),
        ),
        compiler_params=pltpu.CompilerParams(
            dimension_semantics=("parallel", "parallel", "parallel"),
            vmem_limit_bytes=budget),
        cost_estimate=scale_cost,
    )(a_col, xv)

    return out.reshape(bt, C, H, W)


class CosegAttentionPallas:
    """Mirrors CosegAttention: a list of attention modules dispatched by index i."""

    def __init__(self, attention_types, num_feat_maps, h_w, t, key, reduction=4):
        del h_w  # spatial size is read from x at call time
        self.t = t
        self.params = []
        for _atype, c in zip(attention_types, num_feat_maps):
            key, k1, k2 = jax.random.split(key, 3)
            cr = max(c // reduction, 1)
            w1 = jax.random.normal(k1, (c, cr), jnp.float32) * 0.1
            w2 = jax.random.normal(k2, (cr, c), jnp.float32) * 0.1
            self.params.append((w1, w2))

    def __call__(self, x, i, b, t):
        w1, w2 = self.params[i]
        return coseg_se_attention(x, w1, w2, b, t, False)


def _reference(x_bt_chw, w1, w2, b, t):
    """Pure-JAX reference of the coseg SE attention."""
    bt, C, H, W = x_bt_chw.shape
    xv = x_bt_chw.reshape(b, t, C, H, W)
    pooled = jnp.mean(xv.astype(jnp.float32), axis=(1, 3, 4))     # (b, C)
    h = jnp.maximum(pooled @ w1, 0.0)
    a = jax.nn.sigmoid(h @ w2)                                    # (b, C)
    out = xv * a[:, None, :, None, None].astype(xv.dtype)
    return out.reshape(bt, C, H, W)


if __name__ == "__main__":
    key = jax.random.PRNGKey(0)
    key, kx, kp = jax.random.split(key, 3)

    b, t, C, H, W = 2, 4, 32, 16, 16
    attention_types = ["coseg_se", "coseg_se"]
    num_feat_maps = [C, C]
    h_w = [H, H]

    module = CosegAttentionPallas(attention_types, num_feat_maps, h_w, t, kp)
    x = jax.random.normal(kx, (b * t, C, H, W), jnp.float32)

    i = 0  # attention-module index (static, as in the PyTorch dispatch)
    y = jax.block_until_ready(module(x, i, b, t))          # fused single-pass path
    y_ref = _reference(x, *module.params[i], b, t)
    assert y.shape == x.shape and y.dtype == x.dtype
    assert jnp.allclose(y, y_ref, atol=1e-5, rtol=1e-5), "fused path mismatch vs reference"

    # Also exercise the two-pass fallback (used when a video doesn't fit VMEM).
    w1, w2 = module.params[i]
    y2 = jax.block_until_ready(coseg_se_attention(x, w1, w2, b, t, True))
    assert jnp.allclose(y2, y_ref, atol=1e-5, rtol=1e-5), "two-pass path mismatch vs reference"

    print("KERNEL_OK")
</pallas_src>

<mosaic_0001>
module attributes {stable_mosaic.version = 11 : i64} {
  func.func @_fused_kernel(%arg0: i32, %arg1: memref<1x4x32x256xf32, #tpu.memory_space<vmem>>, %arg2: memref<8x32xf32, #tpu.memory_space<vmem>>, %arg3: memref<32x8xf32, #tpu.memory_space<vmem>>, %arg4: memref<1x4x32x256xf32, #tpu.memory_space<vmem>>) attributes {dimension_semantics = [#tpu.dimension_semantics<parallel>], iteration_bounds = array<i64: 2>, scalar_prefetch = 0 : i64, scratch_operands = 0 : i64, tpu.core_type = #tpu.core_type<tc>, window_params = [{transform_indices = @transform_0, window_bounds = array<i64: 1, 4, 32, 256>}, {pipeline_mode = #tpu.pipeline_mode<synchronous>, transform_indices = @transform_1, window_bounds = array<i64: 8, 32>}, {pipeline_mode = #tpu.pipeline_mode<synchronous>, transform_indices = @transform_2, window_bounds = array<i64: 32, 8>}, {transform_indices = @transform_3, window_bounds = array<i64: 1, 4, 32, 256>}]} {
    %c0 = arith.constant 0 : index
    %c0_0 = arith.constant 0 : index
    %c0_1 = arith.constant 0 : index
    %c0_2 = arith.constant 0 : index
    %0 = vector.load %arg1[%c0, %c0_0, %c0_1, %c0_2] : memref<1x4x32x256xf32, #tpu.memory_space<vmem>>, vector<1x4x32x256xf32>
    %1 = vector.shape_cast %0 : vector<1x4x32x256xf32> to vector<4x32x256xf32>
    %cst = arith.constant dense<0.000000e+00> : vector<4x32xf32>
    %2 = vector.multi_reduction <add>, %1, %cst [2] : vector<4x32x256xf32> to vector<4x32xf32>
    %3 = vector.shape_cast %2 : vector<4x32xf32> to vector<4x32x1xf32>
    %cst_3 = arith.constant dense<0.000000e+00> : vector<32x1xf32>
    %4 = vector.multi_reduction <add>, %3, %cst_3 [0] : vector<4x32x1xf32> to vector<32x1xf32>
    %c0_4 = arith.constant 0 : index
    %c0_5 = arith.constant 0 : index
    %5 = vector.load %arg2[%c0_4, %c0_5] : memref<8x32xf32, #tpu.memory_space<vmem>>, vector<8x32xf32>
    %cst_6 = arith.constant dense<0.000000e+00> : vector<8x1xf32>
    %6 = tpu.matmul %5, %4, %cst_6 {dimension_numbers = #tpu.dot_dimension_numbers<[1], [0], [0], [1], [0, 0, 1, 1], [], []>} : vector<8x32xf32>, vector<32x1xf32>, vector<8x1xf32> -> vector<8x1xf32>
    %cst_7 = arith.constant 0.000000e+00 : f32
    %7 = vector.broadcast %cst_7 : f32 to vector<8x1xf32>
    %8 = arith.maximumf %6, %7 : vector<8x1xf32>
    %c0_8 = arith.constant 0 : index
    %c0_9 = arith.constant 0 : index
    %9 = vector.load %arg3[%c0_8, %c0_9] : memref<32x8xf32, #tpu.memory_space<vmem>>, vector<32x8xf32>
    %cst_10 = arith.constant dense<0.000000e+00> : vector<32x1xf32>
    %10 = tpu.matmul %9, %8, %cst_10 {dimension_numbers = #tpu.dot_dimension_numbers<[1], [0], [0], [1], [0, 0, 1, 1], [], []>} : vector<32x8xf32>, vector<8x1xf32>, vector<32x1xf32> -> vector<32x1xf32>
    %11 = arith.negf %10 : vector<32x1xf32>
    %12 = math.exp %11 : vector<32x1xf32>
    %cst_11 = arith.constant 1.000000e+00 : f32
    %13 = vector.broadcast %cst_11 : f32 to vector<32x1xf32>
    %14 = arith.addf %13, %12 : vector<32x1xf32>
    %15 = arith.divf %13, %14 : vector<32x1xf32>
    %c0_12 = arith.constant 0 : index
    %c0_13 = arith.constant 0 : index
    %c0_14 = arith.constant 0 : index
    %c0_15 = arith.constant 0 : index
    %16 = vector.load %arg1[%c0_12, %c0_13, %c0_14, %c0_15] : memref<1x4x32x256xf32, #tpu.memory_space<vmem>>, vector<1x4x32x256xf32>
    %17 = vector.shape_cast %16 : vector<1x4x32x256xf32> to vector<4x32x256xf32>
    %18 = vector.shape_cast %15 : vector<32x1xf32> to vector<1x32x1xf32>
    %19 = vector.broadcast %18 : vector<1x32x1xf32> to vector<4x32x256xf32>
    %20 = arith.mulf %17, %19 : vector<4x32x256xf32>
    %c0_16 = arith.constant 0 : index
    %c0_17 = arith.constant 0 : index
    %c0_18 = arith.constant 0 : index
    %c0_19 = arith.constant 0 : index
    %21 = vector.load %arg4[%c0_16, %c0_17, %c0_18, %c0_19] : memref<1x4x32x256xf32, #tpu.memory_space<vmem>>, vector<1x4x32x256xf32>
    %22 = vector.shape_cast %21 : vector<1x4x32x256xf32> to vector<4x32x256xf32>
    %23 = vector.shape_cast %20 : vector<4x32x256xf32> to vector<1x4x32x256xf32>
    tpu.vector_store %arg4[%c0_16, %c0_17, %c0_18, %c0_19], %23 {strides = array<i32>} : memref<1x4x32x256xf32, #tpu.memory_space<vmem>>, vector<1x4x32x256xf32>,
    return
  }
  func.func @transform_0(%arg0: i32) -> (i32, i32, i32, i32) {
    %c0_i32 = arith.constant 0 : i32
    %c0_i32_0 = arith.constant 0 : i32
    %c0_i32_1 = arith.constant 0 : i32
    %c0_i32_2 = arith.constant 0 : i32
    return %arg0, %c0_i32, %c0_i32_0, %c0_i32_1 : i32, i32, i32, i32
  }
  func.func @transform_1(%arg0: i32) -> (i32, i32) {
    %c0_i32 = arith.constant 0 : i32
    %c0_i32_0 = arith.constant 0 : i32
    %c0_i32_1 = arith.constant 0 : i32
    return %c0_i32, %c0_i32_0 : i32, i32
  }
  func.func @transform_2(%arg0: i32) -> (i32, i32) {
    %c0_i32 = arith.constant 0 : i32
    %c0_i32_0 = arith.constant 0 : i32
    %c0_i32_1 = arith.constant 0 : i32
    return %c0_i32, %c0_i32_0 : i32, i32
  }
  func.func @transform_3(%arg0: i32) -> (i32, i32, i32, i32) {
    %c0_i32 = arith.constant 0 : i32
    %c0_i32_0 = arith.constant 0 : i32
    %c0_i32_1 = arith.constant 0 : i32
    %c0_i32_2 = arith.constant 0 : i32
    return %arg0, %c0_i32, %c0_i32_0, %c0_i32_1 : i32, i32, i32, i32
  }
}

</mosaic_0001>

<llo_original>
// kernel: coseg_se_attention.1
$region0: #{coseg_se_attention.1}
  #allocation0 [shape = 'u32[]', space=smem, size = 0x4, offset = 0x4, fixed_abs, tag = 'smem constant byte address 0x4 - core index']
  #allocation1 [shape = 'u32[72,128]{1,0:T(1,128)}', space=vmem, size = 0x9000, scoped, tag = 'internal scratch']
  %s0 = inlined_call_operand.vmem [shape: f32[2,4,32,256], index: 0, kind: input, shape index: {}]
  %s1 = inlined_call_operand.vmem [shape: f32[8,32], index: 1, kind: input, shape index: {}]
  %s2 = inlined_call_operand.vmem [shape: f32[32,8], index: 2, kind: input, shape index: {}]
  %s3 = inlined_call_operand.vmem [shape: f32[2,4,32,256], index: 3, kind: output, shape index: {}]
  %s4 = sld [smem:[#allocation0]]
  $region45: #{coseg_se_attention.1} parent=0
    _
  %s6 = ssub.s32 1, %s4
  %s7 = scalar_select 0, %s6, %s4
  loop: start=0, step=1, limit=4
  $region2: #{coseg_se_attention.1} parent=0 // loop_pre_header
    _
  $region3: #{coseg_se_attention.1} parent=0 // loop_header
    %s9 = sphi 0, %s13
    %p10 = scmp.ge.s32.totalorder %s9, 4
    %s19 = sphi 0, %s21
    %s22 = sphi 0, %s19
    %s23 = sphi 0, %s22
    %s39 = sphi 0, %s23
    %s43 = sphi 0, %s43
    %s45 = sphi 0, %s43
    %s46 = sphi 0, %s45
    %s60 = sphi 0, %s46
    %s64 = sphi 0, %s64
    %s66 = sphi 0, %s64
    %s67 = sphi 0, %s66
    %s81 = sphi 0, %s67
    %s87 = sphi 0, %s89
    %s90 = sphi 0, %s87
    %s91 = sphi 0, %s90
    %s107 = sphi 0, %s91
  $region4: #{coseg_se_attention.1} parent=0 // loop_header_branch
    %12 = sbr.rel (%p10) target = $region8
  $region5: #{coseg_se_attention.1} parent=0 // loop_body
    %s14 = ssub.s32 %s9, 1
    %s15 = ssub.s32 %s9, 2
    %s16 = sadd.s32 %s9, 1
    %s17 = ssub.s32 %s9, %s16
    %p18 = scmp.eq.s32.totalorder %s17, 0
    %s20 = sadd.s32 %s19, 1
    %s21 = scalar_select %p18, %s19, %s20
    %p24 = pneg %p18
    %p25 = scmp.eq.s32.totalorder %s9, 1
    %p26 = por %p24, %p25
    %p27 = scmp.ne.s32.totalorder %s19, %s22
    %p28 = scmp.eq.s32.totalorder %s9, 0
    %p29 = por %p27, %p28
    %p30 = scmp.ne.s32.totalorder %s19, %s22
    %p31 = scmp.eq.s32.totalorder %s14, 1
    %p32 = por %p30, %p31
    %p33 = scmp.ne.s32.totalorder %s22, %s23
    %p34 = scmp.eq.s32.totalorder %s14, 0
    %p35 = por %p33, %p34
    %p36 = scmp.ne.s32.totalorder %s22, %s23
    %p37 = scmp.eq.s32.totalorder %s15, 1
    %p38 = por %p36, %p37
    %p40 = scmp.ne.s32.totalorder %s23, %s39
    %p41 = scmp.eq.s32.totalorder %s15, 0
    %p42 = por %p40, %p41
    %s44 = sadd.s32 %s43, 1
    %p47 = scmp.eq.s32.totalorder %s9, 1
    %p48 = scmp.ne.s32.totalorder %s43, %s45
    %p49 = scmp.eq.s32.totalorder %s9, 0
    %p50 = por %p48, %p49
    %p51 = scmp.ne.s32.totalorder %s43, %s45
    %p52 = scmp.eq.s32.totalorder %s14, 1
    %p53 = por %p51, %p52
    %p54 = scmp.ne.s32.totalorder %s45, %s46
    %p55 = scmp.eq.s32.totalorder %s14, 0
    %p56 = por %p54, %p55
    %p57 = scmp.ne.s32.totalorder %s45, %s46
    %p58 = scmp.eq.s32.totalorder %s15, 1
    %p59 = por %p57, %p58
    %p61 = scmp.ne.s32.totalorder %s46, %s60
    %p62 = scmp.eq.s32.totalorder %s15, 0
    %p63 = por %p61, %p62
    %s65 = sadd.s32 %s64, 1
    %p68 = scmp.eq.s32.totalorder %s9, 1
    %p69 = scmp.ne.s32.totalorder %s64, %s66
    %p70 = scmp.eq.s32.totalorder %s9, 0
    %p71 = por %p69, %p70
    %p72 = scmp.ne.s32.totalorder %s64, %s66
    %p73 = scmp.eq.s32.totalorder %s14, 1
    %p74 = por %p72, %p73
    %p75 = scmp.ne.s32.totalorder %s66, %s67
    %p76 = scmp.eq.s32.totalorder %s14, 0
    %p77 = por %p75, %p76
    %p78 = scmp.ne.s32.totalorder %s66, %s67
    %p79 = scmp.eq.s32.totalorder %s15, 1
    %p80 = por %p78, %p79
    %p82 = scmp.ne.s32.totalorder %s67, %s81
    %p83 = scmp.eq.s32.totalorder %s15, 0
    %p84 = por %p82, %p83
    %s85 = ssub.s32 %s9, %s16
    %p86 = scmp.eq.s32.totalorder %s85, 0
    %s88 = sadd.s32 %s87, 1
    %s89 = scalar_select %p86, %s87, %s88
    %p92 = pneg %p86
    %p93 = scmp.eq.s32.totalorder %s9, 1
    %p94 = por %p92, %p93
    %p95 = scmp.ne.s32.totalorder %s87, %s90
    %p96 = scmp.eq.s32.totalorder %s9, 0
    %p97 = por %p95, %p96
    %p98 = scmp.ne.s32.totalorder %s87, %s90
    %p99 = scmp.eq.s32.totalorder %s14, 1
    %p100 = por %p98, %p99
    %p101 = scmp.ne.s32.totalorder %s90, %s91
    %p102 = scmp.eq.s32.totalorder %s14, 0
    %p103 = por %p101, %p102
    %p104 = scmp.ne.s32.totalorder %s90, %s91
    %p105 = scmp.eq.s32.totalorder %s15, 1
    %p106 = por %p104, %p105
    %p108 = scmp.ne.s32.totalorder %s91, %s107
    %p109 = scmp.eq.s32.totalorder %s15, 0
    %p110 = por %p108, %p109
    %p111 = scmp.le.s32.totalorder 1, %s9
    %p112 = scmp.lt.s32.totalorder %s9, 3
    %p113 = pnand %p111, %p112
    %p114 = pneg %p113
    // Predicated region
    $region9: #{coseg_se_attention.1} parent=5 // pred_check
      _
    $region10: #{coseg_se_attention.1} parent=5 // pred_check_branch
      %116 = sbr.rel (%p113) target = $region12
    $region11: #{coseg_se_attention.1} parent=5 // pred_region
      %s117 = ssub.s32 %s9, 1
      // Predicated region
      $region13: #{coseg_se_attention.1} parent=11 // pred_check
        %p118 = pneg %p56
      $region14: #{coseg_se_attention.1} parent=11 // pred_check_branch
        %120 = sbr.rel (%p118) target = $region16
      $region15: #{coseg_se_attention.1} parent=11 // pred_region
        _
      $region16: #{coseg_se_attention.1} parent=11 // pred_fallthru
        _
      // Predicated region
      $region17: #{coseg_se_attention.1} parent=11 // pred_check
        %p121 = pneg %p77
      $region18: #{coseg_se_attention.1} parent=11 // pred_check_branch
        %123 = sbr.rel (%p121) target = $region20
      $region19: #{coseg_se_attention.1} parent=11 // pred_region
        _
      $region20: #{coseg_se_attention.1} parent=11 // pred_fallthru
        _
    $region12: #{coseg_se_attention.1} parent=5 // pred_fallthru
      _
    %p124 = scmp.lt.s32.totalorder %s9, 2
    // Predicated region
    $region21: #{coseg_se_attention.1} parent=5 // pred_check
      %p125 = pneg %p124
    $region22: #{coseg_se_attention.1} parent=5 // pred_check_branch
      %127 = sbr.rel (%p125) target = $region24
    $region23: #{coseg_se_attention.1} parent=5 // pred_region
      // Predicated region
      $region25: #{coseg_se_attention.1} parent=23 // pred_check
        %p128 = pneg %p29
      $region26: #{coseg_se_attention.1} parent=23 // pred_check_branch
        %130 = sbr.rel (%p128) target = $region28
      $region27: #{coseg_se_attention.1} parent=23 // pred_region
        %p131 = scmp.lt.s32.totalorder %s9, 1
        %s132 = scalar_select %p131, %s9, 1
        %s133 = smul.addr %s132, 32
        %s134 = smul.addr %s133, 8
        %s135 = scalar_lea.vmem %s0, %s134
      $region28: #{coseg_se_attention.1} parent=23 // pred_fallthru
        _
    $region24: #{coseg_se_attention.1} parent=5 // pred_fallthru
      _
    %p136 = scmp.le.s32.totalorder 1, %s9
    %p137 = scmp.lt.s32.totalorder %s9, 3
    %p138 = pnand %p136, %p137
    %p139 = pneg %p138
    // Predicated region
    $region29: #{coseg_se_attention.1} parent=5 // pred_check
      _
    $region30: #{coseg_se_attention.1} parent=5 // pred_check_branch
      %141 = sbr.rel (%p138) target = $region32
    $region31: #{coseg_se_attention.1} parent=5 // pred_region
      %s142 = ssub.s32 %s9, 1
      %p143 = scmp.lt.s32.totalorder %s14, 1
      %s144 = scalar_select %p143, %s14, 1
      %s145 = smul.addr %s144, 32
      %s146 = smul.addr %s145, 8
      %s147 = scalar_lea.vmem %s0, %s146
      %p148 = pneg %p35
      %p149 = pneg %p32
      %p150 = pneg %p56
      %p151 = pneg %p53
      %p152 = pneg %p77
      %p153 = pneg %p74
      %p154 = pneg %p103
      %p155 = pneg %p100
      %p156 = scmp.lt.s32.totalorder %s14, 1
      %s157 = scalar_select %p156, %s14, 1
      %s158 = smul.addr %s157, 32
      %s159 = smul.addr %s158, 8
      %s160 = scalar_lea.vmem %s3, %s159
      %p161 = scmp.lt.s32.totalorder %s14, 1
      %s162 = scalar_select %p161, %s14, 1
      %s163 = smul.addr %s162, 32
      %s164 = smul.addr %s163, 8
      %s165 = scalar_lea.vmem %s0, %s164
      %p166 = scmp.lt.s32.totalorder %s14, 1
      %s167 = scalar_select %p166, %s14, 1
      %s168 = smul.addr %s167, 32
      %s169 = smul.addr %s168, 8
      %s170 = scalar_lea.vmem %s3, %s169
      %v171 = vld [vmem:[%s165] sm:$0xff]
      %v172 = vld [vmem:[%s165 + $0x8] sm:$0xff]
      %v173 = vld [vmem:[%s165 + $0x10] sm:$0xff]
      %v174 = vld [vmem:[%s165 + $0x18] sm:$0xff]
      %v175 = vld [vmem:[%s165 + $0x20] sm:$0xff]
      %v176 = vld [vmem:[%s165 + $0x28] sm:$0xff]
      %v177 = vld [vmem:[%s165 + $0x30] sm:$0xff]
      %v178 = vld [vmem:[%s165 + $0x38] sm:$0xff]
      %v179 = vld [vmem:[%s165 + $0x40] sm:$0xff]
      %v180 = vld [vmem:[%s165 + $0x48] sm:$0xff]
      %v181 = vld [vmem:[%s165 + $0x50] sm:$0xff]
      %v182 = vld [vmem:[%s165 + $0x58] sm:$0xff]
      %v183 = vld [vmem:[%s165 + $0x60] sm:$0xff]
      %v184 = vld [vmem:[%s165 + $0x68] sm:$0xff]
      %v185 = vld [vmem:[%s165 + $0x70] sm:$0xff]
      %v186 = vld [vmem:[%s165 + $0x78] sm:$0xff]
      %v187 = vld [vmem:[%s165 + $0x80] sm:$0xff]
      %v188 = vld [vmem:[%s165 + $0x88] sm:$0xff]
      %v189 = vld [vmem:[%s165 + $0x90] sm:$0xff]
      %v190 = vld [vmem:[%s165 + $0x98] sm:$0xff]
      %v191 = vld [vmem:[%s165 + $0xa0] sm:$0xff]
      %v192 = vld [vmem:[%s165 + $0xa8] sm:$0xff]
      %v193 = vld [vmem:[%s165 + $0xb0] sm:$0xff]
      %v194 = vld [vmem:[%s165 + $0xb8] sm:$0xff]
      %v195 = vld [vmem:[%s165 + $0xc0] sm:$0xff]
      %v196 = vld [vmem:[%s165 + $0xc8] sm:$0xff]
      %v197 = vld [vmem:[%s165 + $0xd0] sm:$0xff]
      %v198 = vld [vmem:[%s165 + $0xd8] sm:$0xff]
      %v199 = vld [vmem:[%s165 + $0xe0] sm:$0xff]
      %v200 = vld [vmem:[%s165 + $0xe8] sm:$0xff]
      %v201 = vld [vmem:[%s165 + $0xf0] sm:$0xff]
      %v202 = vld [vmem:[%s165 + $0xf8] sm:$0xff]
      %v203 = vadd.f32 %v171, %v172
      %204 = vadd.xlane.f32.xlu0 %v203
      %v205 = vpop.xlane.xlu0 %204
      %v206 = vadd.f32 %v173, %v174
      %207 = vadd.xlane.f32.xlu0 %v206
      %v208 = vpop.xlane.xlu0 %207
      %v209 = vadd.f32 %v175, %v176
      %210 = vadd.xlane.f32.xlu0 %v209
      %v211 = vpop.xlane.xlu0 %210
      %v212 = vadd.f32 %v177, %v178
      %213 = vadd.xlane.f32.xlu0 %v212
      %v214 = vpop.xlane.xlu0 %213
      %v215 = vadd.f32 %v179, %v180
      %216 = vadd.xlane.f32.xlu0 %v215
      %v217 = vpop.xlane.xlu0 %216
      %v218 = vadd.f32 %v181, %v182
      %219 = vadd.xlane.f32.xlu0 %v218
      %v220 = vpop.xlane.xlu0 %219
      %v221 = vadd.f32 %v183, %v184
      %222 = vadd.xlane.f32.xlu0 %v221
      %v223 = vpop.xlane.xlu0 %222
      %v224 = vadd.f32 %v185, %v186
      %225 = vadd.xlane.f32.xlu0 %v224
      %v226 = vpop.xlane.xlu0 %225
      %v227 = vadd.f32 %v187, %v188
      %228 = vadd.xlane.f32.xlu0 %v227
      %v229 = vpop.xlane.xlu0 %228
      %v230 = vadd.f32 %v189, %v190
      %231 = vadd.xlane.f32.xlu0 %v230
      %v232 = vpop.xlane.xlu0 %231
      %v233 = vadd.f32 %v191, %v192
      %234 = vadd.xlane.f32.xlu0 %v233
      %v235 = vpop.xlane.xlu0 %234
      %v236 = vadd.f32 %v193, %v194
      %237 = vadd.xlane.f32.xlu0 %v236
      %v238 = vpop.xlane.xlu0 %237
      %v239 = vadd.f32 %v195, %v196
      %240 = vadd.xlane.f32.xlu0 %v239
      %v241 = vpop.xlane.xlu0 %240
      %v242 = vadd.f32 %v197, %v198
      %243 = vadd.xlane.f32.xlu0 %v242
      %v244 = vpop.xlane.xlu0 %243
      %v245 = vadd.f32 %v199, %v200
      %246 = vadd.xlane.f32.xlu0 %v245
      %v247 = vpop.xlane.xlu0 %246
      %v248 = vadd.f32 %v201, %v202
      %249 = vadd.xlane.f32.xlu0 %v248
      %v250 = vpop.xlane.xlu0 %249
      %v251 = vadd.f32 %v205, %v217
      %v252 = vadd.f32 %v251, %v229
      %v253 = vadd.f32 %v252, %v241
      %v254 = vadd.f32 %v208, %v220
      %v255 = vadd.f32 %v254, %v232
      %v256 = vadd.f32 %v255, %v244
      %v257 = vadd.f32 %v211, %v223
      %v258 = vadd.f32 %v257, %v235
      %v259 = vadd.f32 %v258, %v247
      %v260 = vadd.f32 %v214, %v226
      %v261 = vadd.f32 %v260, %v238
      %v262 = vadd.f32 %v261, %v250
      %v263 = vld [vmem:[%s1] sm:$0xff]
      %vm264 = vcmask 261120
      %v266 = vsel %vm264, %v263, 0
      %268 = vmatpush.msra.mxu0 0.0
      %269 = vmatpush.msra.mxu0 0.0
      %270 = vmatpush.msra.mxu0 0.0
      %271 = vmatpush.msra.mxu0 0.0
      %272 = vmatpush.msra.mxu0 0.0
      %273 = vmatpush.msra.mxu0 0.0
      %274 = vmatpush.msra.mxu0 0.0
      %275 = vmatpush.msra.mxu0 0.0
      %276 = vmatpush.msra.mxu0 0.0
      %277 = vmatpush.msra.mxu0 0.0
      %278 = vmatpush.msra.mxu0 0.0
      %279 = vmatpush.msra.mxu0 0.0
      %280 = vmatpush.msra.mxu0 %v262
      %281 = vmatpush.msra.mxu0 %v259
      %282 = vmatpush.msra.mxu0 %v256
      %283 = vmatpush.msra.mxu0 %v253
      %284 = vmatmul.f32.gmra.mxu0 %v266
      %v285 = vpop.f32.mrf.mxu0
      %v286 = vadd.f32 0.0, %v285
      %287 = vdwg.mxu0
      %v288 = vmax.f32 %v286, 0.0
      %v289 = vld [vmem:[%s2] sm:$0xff]
      %v290 = vld [vmem:[%s2 + $0x8] sm:$0xff]
      %v291 = vld [vmem:[%s2 + $0x10] sm:$0xff]
      %v292 = vld [vmem:[%s2 + $0x18] sm:$0xff]
      %vm293 = vcmask 64512
      %v295 = vsel %vm293, %v289, 0
      %v298 = vsel %vm293, %v290, 0
      %v301 = vsel %vm293, %v291, 0
      %v304 = vsel %vm293, %v292, 0
      %306 = vmatpush.msra.mxu0 0.0
      %307 = vmatpush.msra.mxu0 0.0
      %308 = vmatpush.msra.mxu0 0.0
      %309 = vmatpush.msra.mxu0 0.0
      %310 = vmatpush.msra.mxu0 0.0
      %311 = vmatpush.msra.mxu0 0.0
      %312 = vmatpush.msra.mxu0 0.0
      %313 = vmatpush.msra.mxu0 0.0
      %314 = vmatpush.msra.mxu0 0.0
      %315 = vmatpush.msra.mxu0 0.0
      %316 = vmatpush.msra.mxu0 0.0
      %317 = vmatpush.msra.mxu0 0.0
      %318 = vmatpush.msra.mxu0 0.0
      %319 = vmatpush.msra.mxu0 0.0
      %320 = vmatpush.msra.mxu0 0.0
      %321 = vmatpush.msra.mxu0 %v288
      %322 = vmatmul.f32.gmra.mxu0 %v295
      %v323 = vpop.f32.mrf.mxu0
      %v324 = vadd.f32 0.0, %v323
      %325 = vmatmul.f32.gmra.mxu0 %v298
      %v326 = vpop.f32.mrf.mxu0
      %v327 = vadd.f32 0.0, %v326
      %328 = vmatmul.f32.gmra.mxu0 %v301
      %v329 = vpop.f32.mrf.mxu0
      %v330 = vadd.f32 0.0, %v329
      %331 = vmatmul.f32.gmra.mxu0 %v304
      %v332 = vpop.f32.mrf.mxu0
      %v333 = vadd.f32 0.0, %v332
      %334 = vdwg.mxu0
      %v335 = vxor.u32 %v324, 2147483648
      %v336 = vxor.u32 %v327, 2147483648
      %v337 = vxor.u32 %v330, 2147483648
      %v338 = vxor.u32 %v333, 2147483648
      %v339 = vmul.f32 %v335, 1.442695
      %v340 = vpow.pop %v339
      %v341 = vmul.f32 %v336, 1.442695
      %v342 = vpow.pop %v341
      %v343 = vmul.f32 %v337, 1.442695
      %v344 = vpow.pop %v343
      %v345 = vmul.f32 %v338, 1.442695
      %v346 = vpow.pop %v345
      %v347 = vadd.f32 %v340, 1.0
      %v348 = vadd.f32 %v342, 1.0
      %v349 = vadd.f32 %v344, 1.0
      %v350 = vadd.f32 %v346, 1.0
      %v351 = vrcp.pop %v347
      %v352 = vmul.f32 %v347, %v351
      %v353 = vsub.f32 1.0, %v352
      %v354 = vmul.f32 %v351, %v353
      %v355 = vadd.f32 %v351, %v354
      %vm356 = vweird.f32 %v347
      %vm357 = vweird.f32 %v351
      %vm358 = vmor %vm356, %vm357
      %v359 = vsel %vm358, %v351, %v355
      %v360 = vand.u32 2147483647, %v347
      %vm361 = vcmp.eq.f32.partialorder %v360, 8.507059e+37
      %v362 = vand.u32 %v347, 2147483648
      %v363 = vor.u32 1.1754944e-38, %v362
      %v364 = vsel %vm361, %v363, %v359
      %v365 = vmul.f32 1.0, %v364
      %v366 = vrcp.pop %v348
      %v367 = vmul.f32 %v348, %v366
      %v368 = vsub.f32 1.0, %v367
      %v369 = vmul.f32 %v366, %v368
      %v370 = vadd.f32 %v366, %v369
      %vm371 = vweird.f32 %v348
      %vm372 = vweird.f32 %v366
      %vm373 = vmor %vm371, %vm372
      %v374 = vsel %vm373, %v366, %v370
      %v375 = vand.u32 2147483647, %v348
      %vm376 = vcmp.eq.f32.partialorder %v375, 8.507059e+37
      %v377 = vand.u32 %v348, 2147483648
      %v378 = vor.u32 1.1754944e-38, %v377
      %v379 = vsel %vm376, %v378, %v374
      %v380 = vmul.f32 1.0, %v379
      %v381 = vrcp.pop %v349
      %v382 = vmul.f32 %v349, %v381
      %v383 = vsub.f32 1.0, %v382
      %v384 = vmul.f32 %v381, %v383
      %v385 = vadd.f32 %v381, %v384
      %vm386 = vweird.f32 %v349
      %vm387 = vweird.f32 %v381
      %vm388 = vmor %vm386, %vm387
      %v389 = vsel %vm388, %v381, %v385
      %v390 = vand.u32 2147483647, %v349
      %vm391 = vcmp.eq.f32.partialorder %v390, 8.507059e+37
      %v392 = vand.u32 %v349, 2147483648
      %v393 = vor.u32 1.1754944e-38, %v392
      %v394 = vsel %vm391, %v393, %v389
      %v395 = vmul.f32 1.0, %v394
      %v396 = vrcp.pop %v350
      %v397 = vmul.f32 %v350, %v396
      %v398 = vsub.f32 1.0, %v397
      %v399 = vmul.f32 %v396, %v398
      %v400 = vadd.f32 %v396, %v399
      %vm401 = vweird.f32 %v350
      %vm402 = vweird.f32 %v396
      %vm403 = vmor %vm401, %vm402
      %v404 = vsel %vm403, %v396, %v400
      %v405 = vand.u32 2147483647, %v350
      %vm406 = vcmp.eq.f32.partialorder %v405, 8.507059e+37
      %v407 = vand.u32 %v350, 2147483648
      %v408 = vor.u32 1.1754944e-38, %v407
      %v409 = vsel %vm406, %v408, %v404
      %v410 = vmul.f32 1.0, %v409
      %412 = vset.pattern.permute.xlu0 0
      %413 = vperm.xlu0 %412, %v365
      %v414 = vpop.permute.xlu0 %413
      %417 = vset.pattern.permute.xlu0 0
      %418 = vperm.xlu0 %417, %v380
      %v419 = vpop.permute.xlu0 %418
      %422 = vset.pattern.permute.xlu0 0
      %423 = vperm.xlu0 %422, %v395
      %v424 = vpop.permute.xlu0 %423
      %427 = vset.pattern.permute.xlu0 0
      %428 = vperm.xlu0 %427, %v410
      %v429 = vpop.permute.xlu0 %428
      %v431 = vmul.f32 %v171, %v414
      %v432 = vmul.f32 %v172, %v414
      %v433 = vmul.f32 %v173, %v419
      %v434 = vmul.f32 %v174, %v419
      %v435 = vmul.f32 %v175, %v424
      %v436 = vmul.f32 %v176, %v424
      %v437 = vmul.f32 %v177, %v429
      %v438 = vmul.f32 %v178, %v429
      %v439 = vmul.f32 %v179, %v414
      %v440 = vmul.f32 %v180, %v414
      %v441 = vmul.f32 %v181, %v419
      %v442 = vmul.f32 %v182, %v419
      %v443 = vmul.f32 %v183, %v424
      %v444 = vmul.f32 %v184, %v424
      %v445 = vmul.f32 %v185, %v429
      %v446 = vmul.f32 %v186, %v429
      %v447 = vmul.f32 %v187, %v414
      %v448 = vmul.f32 %v188, %v414
      %v449 = vmul.f32 %v189, %v419
      %v450 = vmul.f32 %v190, %v419
      %v451 = vmul.f32 %v191, %v424
      %v452 = vmul.f32 %v192, %v424
      %v453 = vmul.f32 %v193, %v429
      %v454 = vmul.f32 %v194, %v429
      %v455 = vmul.f32 %v195, %v414
      %v456 = vmul.f32 %v196, %v414
      %v457 = vmul.f32 %v197, %v419
      %v458 = vmul.f32 %v198, %v419
      %v459 = vmul.f32 %v199, %v424
      %v460 = vmul.f32 %v200, %v424
      %v461 = vmul.f32 %v201, %v429
      %v462 = vmul.f32 %v202, %v429
      %463 = vst [vmem:[%s170] sm:$0xff] %v431
      %464 = vst [vmem:[%s170 + $0x8] sm:$0xff] %v432
      %465 = vst [vmem:[%s170 + $0x10] sm:$0xff] %v433
      %466 = vst [vmem:[%s170 + $0x18] sm:$0xff] %v434
      %467 = vst [vmem:[%s170 + $0x20] sm:$0xff] %v435
      %468 = vst [vmem:[%s170 + $0x28] sm:$0xff] %v436
      %469 = vst [vmem:[%s170 + $0x30] sm:$0xff] %v437
      %470 = vst [vmem:[%s170 + $0x38] sm:$0xff] %v438
      %471 = vst [vmem:[%s170 + $0x40] sm:$0xff] %v439
      %472 = vst [vmem:[%s170 + $0x48] sm:$0xff] %v440
      %473 = vst [vmem:[%s170 + $0x50] sm:$0xff] %v441
      %474 = vst [vmem:[%s170 + $0x58] sm:$0xff] %v442
      %475 = vst [vmem:[%s170 + $0x60] sm:$0xff] %v443
      %476 = vst [vmem:[%s170 + $0x68] sm:$0xff] %v444
      %477 = vst [vmem:[%s170 + $0x70] sm:$0xff] %v445
      %478 = vst [vmem:[%s170 + $0x78] sm:$0xff] %v446
      %479 = vst [vmem:[%s170 + $0x80] sm:$0xff] %v447
      %480 = vst [vmem:[%s170 + $0x88] sm:$0xff] %v448
      %481 = vst [vmem:[%s170 + $0x90] sm:$0xff] %v449
      %482 = vst [vmem:[%s170 + $0x98] sm:$0xff] %v450
      %483 = vst [vmem:[%s170 + $0xa0] sm:$0xff] %v451
      %484 = vst [vmem:[%s170 + $0xa8] sm:$0xff] %v452
      %485 = vst [vmem:[%s170 + $0xb0] sm:$0xff] %v453
      %486 = vst [vmem:[%s170 + $0xb8] sm:$0xff] %v454
      %487 = vst [vmem:[%s170 + $0xc0] sm:$0xff] %v455
      %488 = vst [vmem:[%s170 + $0xc8] sm:$0xff] %v456
      %489 = vst [vmem:[%s170 + $0xd0] sm:$0xff] %v457
      %490 = vst [vmem:[%s170 + $0xd8] sm:$0xff] %v458
      %491 = vst [vmem:[%s170 + $0xe0] sm:$0xff] %v459
      %492 = vst [vmem:[%s170 + $0xe8] sm:$0xff] %v460
      %493 = vst [vmem:[%s170 + $0xf0] sm:$0xff] %v461
      %494 = vst [vmem:[%s170 + $0xf8] sm:$0xff] %v462
      %p495 = scmp.lt.s32.totalorder %s14, 1
      %s496 = scalar_select %p495, %s14, 1
      %s497 = smul.addr %s496, 32
      %s498 = smul.addr %s497, 8
      %s499 = scalar_lea.vmem %s3, %s498
      // Predicated region
      $region33: #{coseg_se_attention.1} parent=31 // pred_check
        %p500 = pneg %p100
      $region34: #{coseg_se_attention.1} parent=31 // pred_check_branch
        %502 = sbr.rel (%p500) target = $region36
      $region35: #{coseg_se_attention.1} parent=31 // pred_region
        _
      $region36: #{coseg_se_attention.1} parent=31 // pred_fallthru
        _
    $region32: #{coseg_se_attention.1} parent=5 // pred_fallthru
      _
    %p503 = scmp.le.s32.totalorder 2, %s9
    // Predicated region
    $region37: #{coseg_se_attention.1} parent=5 // pred_check
      %p504 = pneg %p503
    $region38: #{coseg_se_attention.1} parent=5 // pred_check_branch
      %506 = sbr.rel (%p504) target = $region40
    $region39: #{coseg_se_attention.1} parent=5 // pred_region
      %s507 = ssub.s32 %s9, 2
      // Predicated region
      $region41: #{coseg_se_attention.1} parent=39 // pred_check
        %p508 = pneg %p106
      $region42: #{coseg_se_attention.1} parent=39 // pred_check_branch
        %510 = sbr.rel (%p508) target = $region44
      $region43: #{coseg_se_attention.1} parent=39 // pred_region
        %p511 = scmp.lt.s32.totalorder %s15, 1
        %s512 = scalar_select %p511, %s15, 1
        %s513 = smul.addr %s512, 32
        %s514 = smul.addr %s513, 8
        %s515 = scalar_lea.vmem %s3, %s514
      $region44: #{coseg_se_attention.1} parent=39 // pred_fallthru
        _
    $region40: #{coseg_se_attention.1} parent=5 // pred_fallthru
      _
  $region6: #{coseg_se_attention.1} parent=0 // loop_footer
    %s13 = sadd.s32 1, %s9
  $region7: #{coseg_se_attention.1} parent=0 // loop_footer_branch
    %8 = sbr.rel target = $region3
  $region8: #{coseg_se_attention.1} parent=0 // loop_exit
    _

</llo_original>
